<compile_context>
chip_gen: v5e
topology: v5e:2x2
jax: 0.10.0
libtpu: 0.0.40
codegen_flags: <defaults>
</compile_context>

<pallas_src>
import jax
import jax.numpy as jnp
from jax.experimental import pallas as pl
from jax.experimental.pallas import tpu as pltpu


def _round_up(x, m):
    return ((x + m - 1) // m) * m


def _patch_embed_kernel(a_ref, w_ref, b_ref, o_ref):
    # a_ref: (TM, K)   bf16 patch tile
    # w_ref: (K, Ep)   bf16 projection matrix (flattened Conv3d weight, transposed)
    # b_ref: (1, Ep)   f32 bias
    # o_ref: (TM, Ep)  output tile
    acc = jnp.dot(a_ref[...], w_ref[...], preferred_element_type=jnp.float32)
    o_ref[...] = (acc + b_ref[...]).astype(o_ref.dtype)


def _vmem_config():
    """(vmem_budget_for_tiling, vmem_limit_bytes, min_grid_steps) per chip generation."""
    cap = 64 * 1024 * 1024  # conservative fallback (v7x-sized)
    try:
        cap = int(pltpu.get_tpu_info().vmem_capacity_bytes)
    except Exception:
        pass
    if cap >= 100 * 1024 * 1024:
        # v5e / v6e: 128 MiB physical VMEM, single TensorCore per chip.
        return 80 * 1024 * 1024, 96 * 1024 * 1024, 2
    # v7x: 64 MiB per TensorCore, 2 TCs share the grid -> keep headroom and
    # require >= 4 steps (>= 2 per core for double-buffering).
    return 44 * 1024 * 1024, 56 * 1024 * 1024, 4


def _choose_tile_m(M, K, E_pad, *, lhs_bytes=2, w_bytes=2, out_bytes=4,
                   vmem_budget=44 * 1024 * 1024, min_steps=2):
    """Row tile: <= 1024, >= 16, power of two (hence a multiple of 8), fits the
    VMEM budget, doesn't exceed M, and leaves >= min_steps grid steps when M allows."""
    tile_m = 1024

    # Don't use a tile that is more than 2x larger than needed to cover M.
    while tile_m > 16 and _round_up(M, 8) <= tile_m // 2:
        tile_m //= 2

    # Leave enough grid steps for megacore sharding + per-core double buffering.
    while tile_m > 128 and pl.cdiv(M, tile_m) < min_steps:
        tile_m //= 2

    def usage(tm):
        return (2 * tm * K * lhs_bytes        # LHS double buffer
                + 2 * K * E_pad * w_bytes     # weight (double-buffered by Pallas)
                + 2 * tm * E_pad * out_bytes  # output double buffer
                + 2 * E_pad * 4)              # bias

    while tile_m > 16 and usage(tile_m) > vmem_budget:
        tile_m //= 2
    return max(tile_m, 16)


def patch_embed_matmul(patches, w, b, *, out_dtype=None, tile_m=None):
    """patches: (M, K), w: (K, E), b: (E,) -> (M, E) via a tiled Pallas MXU matmul."""
    M, K = patches.shape
    K2, E = w.shape
    assert K == K2
    if out_dtype is None:
        out_dtype = patches.dtype
    out_itemsize = jnp.dtype(out_dtype).itemsize

    # Output lane width: pad to a multiple of 128 only when E >= 128 and not
    # already aligned (real VideoMAE dims 768/1024 need no pad/slice). For tiny
    # E (< 128) keep it un-padded: masked stores write far fewer bytes than a
    # 128-padded output + slice pass would.
    if E % 128 == 0 or E < 128:
        E_pad = E
    else:
        E_pad = _round_up(E, 128)

    vmem_budget, vmem_limit, min_steps = _vmem_config()
    if tile_m is None:
        tile_m = _choose_tile_m(M, K, E_pad, out_bytes=out_itemsize,
                                vmem_budget=vmem_budget, min_steps=min_steps)

    # bf16 operands (native MXU format, halves HBM/VMEM bytes); f32 accumulate in-kernel.
    # XLA fuses the patch-extraction transpose + this cast into one contiguous pass.
    a = patches.astype(jnp.bfloat16)
    wmat = w.astype(jnp.bfloat16)
    bias = b.astype(jnp.float32)
    if E_pad != E:
        wmat = jnp.pad(wmat, ((0, 0), (0, E_pad - E)))
        bias = jnp.pad(bias, ((0, E_pad - E),))
    bias = bias.reshape(1, E_pad)

    # Ragged last block along M is handled by Pallas masking; no jnp.pad / slice.
    grid = (pl.cdiv(M, tile_m),)
    flops = 2 * M * K * E_pad
    bytes_accessed = (M * K * 2 + K * E_pad * 2 + E_pad * 4
                      + M * E_pad * out_itemsize)

    out = pl.pallas_call(
        _patch_embed_kernel,
        out_shape=jax.ShapeDtypeStruct((M, E_pad), out_dtype),
        grid=grid,
        in_specs=[
            pl.BlockSpec((tile_m, K), lambda i: (i, 0)),
            pl.BlockSpec((K, E_pad), lambda i: (0, 0)),   # weight resident (constant index)
            pl.BlockSpec((1, E_pad), lambda i: (0, 0)),
        ],
        out_specs=pl.BlockSpec((tile_m, E_pad), lambda i: (i, 0)),
        compiler_params=pltpu.CompilerParams(
            dimension_semantics=("parallel",),
            vmem_limit_bytes=vmem_limit,
        ),
        cost_estimate=pl.CostEstimate(
            flops=flops, transcendentals=0, bytes_accessed=bytes_accessed),
    )(a, wmat, bias)

    if E_pad != E:
        out = out[:, :E]
    return out


class PatchEmbed:
    """JAX/Pallas port of the VideoMAE PatchEmbed module (Conv3d patch projection)."""

    def __init__(self, img_size=16, patch_size=8, in_chans=4, embed_dim=32,
                 num_frames=4, tubelet_size=2, key=None):
        img_size = (img_size, img_size) if isinstance(img_size, int) else img_size
        patch_size = (patch_size, patch_size) if isinstance(patch_size, int) else patch_size
        self.img_size = img_size
        self.patch_size = patch_size
        self.tubelet_size = int(tubelet_size)
        self.in_chans = in_chans
        self.embed_dim = embed_dim
        self.num_frames = num_frames
        self.num_patches = ((img_size[1] // patch_size[1]) * (img_size[0] // patch_size[0])
                            * (num_frames // self.tubelet_size))

        # Deterministic synthetic parameters (Conv3d weight/bias shapes, PyTorch-style init).
        if key is None:
            key = jax.random.PRNGKey(42)
        kw, kb = jax.random.split(key)
        wshape = (embed_dim, in_chans, self.tubelet_size, patch_size[0], patch_size[1])
        fan_in = in_chans * self.tubelet_size * patch_size[0] * patch_size[1]
        bound = 1.0 / (fan_in ** 0.5)
        self.weight = jax.random.uniform(kw, wshape, jnp.float32, -bound, bound)
        self.bias = jax.random.uniform(kb, (embed_dim,), jnp.float32, -bound, bound)

    def _patches_and_weight(self, x):
        """Extract (M, K) patches in the Conv3d (C, kt, kh, kw) flatten order and
        the flattened (K, E) projection matrix."""
        B, C, T, H, W = x.shape
        kt = self.tubelet_size
        ph, pw = self.patch_size
        Tp, Hp, Wp = T // kt, H // ph, W // pw
        xp = x.reshape(B, C, Tp, kt, Hp, ph, Wp, pw)
        xp = xp.transpose(0, 2, 4, 6, 1, 3, 5, 7)          # (B, Tp, Hp, Wp, C, kt, ph, pw)
        K = C * kt * ph * pw
        M = B * Tp * Hp * Wp
        patches = xp.reshape(M, K)
        wmat = self.weight.reshape(self.embed_dim, K).T     # (K, E)
        return patches, wmat

    def __call__(self, x):
        # x: (B, C, T, H, W)
        B, C, T, H, W = x.shape
        assert H == self.img_size[0] and W == self.img_size[1], \
            f"Input image size ({H}*{W}) doesn't match model ({self.img_size[0]}*{self.img_size[1]})."
        kt = self.tubelet_size
        ph, pw = self.patch_size
        Tp, Hp, Wp = T // kt, H // ph, W // pw

        patches, wmat = self._patches_and_weight(x)
        out = patch_embed_matmul(patches, wmat, self.bias, out_dtype=x.dtype)  # (M, E)
        return out.reshape(B, Tp * Hp * Wp, self.embed_dim)


if __name__ == "__main__":
    # Small shapes: B=2, C=4, T=4, H=W=16, patch=8, tubelet=2, embed_dim=32
    key = jax.random.PRNGKey(0)
    B, C, T, H, W = 2, 4, 4, 16, 16
    x = jax.random.normal(key, (B, C, T, H, W), dtype=jnp.float32)

    mod = PatchEmbed(img_size=16, patch_size=8, in_chans=C, embed_dim=32,
                     num_frames=T, tubelet_size=2, key=jax.random.PRNGKey(1))

    y = jax.block_until_ready(mod(x))
    assert y.shape == (B, mod.num_patches, mod.embed_dim), y.shape

    # Tight check vs. a matmul reference using the same bf16 operand quantization.
    patches, wmat = mod._patches_and_weight(x)
    ref_q = jnp.dot(patches.astype(jnp.bfloat16).astype(jnp.float32),
                    wmat.astype(jnp.bfloat16).astype(jnp.float32),
                    precision=jax.lax.Precision.HIGHEST) + mod.bias[None, :]
    ref_q = ref_q.reshape(y.shape)
    assert jnp.allclose(y, ref_q, atol=2e-3, rtol=2e-3), float(jnp.max(jnp.abs(y - ref_q)))

    # Semantics check vs. plain-JAX f32 Conv3d (stride == kernel, valid padding);
    # tolerance loosened for the bf16 MXU operands.
    ref = jax.lax.conv_general_dilated(
        x, mod.weight,
        window_strides=(mod.tubelet_size, mod.patch_size[0], mod.patch_size[1]),
        padding="VALID",
        dimension_numbers=("NCDHW", "OIDHW", "NCDHW"),
    ) + mod.bias.reshape(1, -1, 1, 1, 1)
    ref = ref.reshape(B, mod.embed_dim, -1).transpose(0, 2, 1)
    assert jnp.allclose(y, ref, atol=3e-2, rtol=3e-2), float(jnp.max(jnp.abs(y - ref)))

    print("KERNEL_OK")
</pallas_src>

<mosaic_0001>
module attributes {stable_mosaic.version = 11 : i64} {
  func.func @_patch_embed_kernel(%arg0: i32, %arg1: memref<16x512xbf16, #tpu.memory_space<vmem>>, %arg2: memref<512x32xbf16, #tpu.memory_space<vmem>>, %arg3: memref<1x32xf32, #tpu.memory_space<vmem>>, %arg4: memref<16x32xf32, #tpu.memory_space<vmem>>) attributes {dimension_semantics = [#tpu.dimension_semantics<parallel>], iteration_bounds = array<i64: 1>, scalar_prefetch = 0 : i64, scratch_operands = 0 : i64, tpu.core_type = #tpu.core_type<tc>, window_params = [{transform_indices = @transform_0, window_bounds = array<i64: 16, 512>}, {pipeline_mode = #tpu.pipeline_mode<synchronous>, transform_indices = @transform_1, window_bounds = array<i64: 512, 32>}, {pipeline_mode = #tpu.pipeline_mode<synchronous>, transform_indices = @transform_2, window_bounds = array<i64: 1, 32>}, {transform_indices = @transform_3, window_bounds = array<i64: 16, 32>}]} {
    %c0 = arith.constant 0 : index
    %c0_0 = arith.constant 0 : index
    %0 = vector.load %arg1[%c0, %c0_0] : memref<16x512xbf16, #tpu.memory_space<vmem>>, vector<16x512xbf16>
    %c0_1 = arith.constant 0 : index
    %c0_2 = arith.constant 0 : index
    %1 = vector.load %arg2[%c0_1, %c0_2] : memref<512x32xbf16, #tpu.memory_space<vmem>>, vector<512x32xbf16>
    %cst = arith.constant dense<0.000000e+00> : vector<16x32xf32>
    %2 = tpu.matmul %0, %1, %cst {dimension_numbers = #tpu.dot_dimension_numbers<[1], [0], [0], [1], [0, 0, 1, 1], [], []>} : vector<16x512xbf16>, vector<512x32xbf16>, vector<16x32xf32> -> vector<16x32xf32>
    %c0_3 = arith.constant 0 : index
    %c0_4 = arith.constant 0 : index
    %3 = vector.load %arg3[%c0_3, %c0_4] : memref<1x32xf32, #tpu.memory_space<vmem>>, vector<1x32xf32>
    %4 = vector.broadcast %3 : vector<1x32xf32> to vector<16x32xf32>
    %5 = arith.addf %2, %4 : vector<16x32xf32>
    %c0_5 = arith.constant 0 : index
    %c0_6 = arith.constant 0 : index
    %6 = vector.load %arg4[%c0_5, %c0_6] : memref<16x32xf32, #tpu.memory_space<vmem>>, vector<16x32xf32>
    tpu.vector_store %arg4[%c0_5, %c0_6], %5 {strides = array<i32>} : memref<16x32xf32, #tpu.memory_space<vmem>>, vector<16x32xf32>,
    return
  }
  func.func @transform_0(%arg0: i32) -> (i32, i32) {
    %c0_i32 = arith.constant 0 : i32
    %c0_i32_0 = arith.constant 0 : i32
    return %arg0, %c0_i32 : i32, i32
  }
  func.func @transform_1(%arg0: i32) -> (i32, i32) {
    %c0_i32 = arith.constant 0 : i32
    %c0_i32_0 = arith.constant 0 : i32
    %c0_i32_1 = arith.constant 0 : i32
    return %c0_i32, %c0_i32_0 : i32, i32
  }
  func.func @transform_2(%arg0: i32) -> (i32, i32) {
    %c0_i32 = arith.constant 0 : i32
    %c0_i32_0 = arith.constant 0 : i32
    %c0_i32_1 = arith.constant 0 : i32
    return %c0_i32, %c0_i32_0 : i32, i32
  }
  func.func @transform_3(%arg0: i32) -> (i32, i32) {
    %c0_i32 = arith.constant 0 : i32
    %c0_i32_0 = arith.constant 0 : i32
    return %arg0, %c0_i32 : i32, i32
  }
}

</mosaic_0001>

<llo_original>
// kernel: tpu_custom_call.1
$region0: #{tpu_custom_call.1}
  #allocation0 [shape = 'u32[]', space=smem, size = 0x4, offset = 0x4, fixed_abs, tag = 'smem constant byte address 0x4 - core index']
  #allocation1 [shape = 'u32[72,128]{1,0:T(1,128)}', space=vmem, size = 0x9000, scoped, tag = 'internal scratch']
  %s0 = inlined_call_operand.vmem [shape: bf16[16,512], index: 0, kind: input, shape index: {}]
  %s1 = inlined_call_operand.vmem [shape: bf16[512,32], index: 1, kind: input, shape index: {}]
  %s2 = inlined_call_operand.vmem [shape: f32[1,32], index: 2, kind: input, shape index: {}]
  %s3 = inlined_call_operand.hbm [shape: f32[16,32], index: 3, kind: output, shape index: {}]
  %s4 = sld [smem:[#allocation0]]
  $region22: #{tpu_custom_call.1} parent=0
    _
  %s6 = ssub.s32 1, %s4
  %s7 = scalar_select 0, %s6, %s4
  $region1: #{tpu_custom_call.1} parent=0
    #allocation2 [shape = 'u8[8192]{0}', space=vmem, size = 0x2000, scoped, tag = 'output window, operand 0, single buffered']
    #allocation3 [shape = 's32[1]{0}', space=sflag, size = 0x4, scoped, tag = 'scoped memory for tpu_custom_call.1']
    %8 = vsyncpa [#allocation3], 0
    // Predicated region
    $region2: #{tpu_custom_call.1} parent=1 // pred_check
      _
    $region3: #{tpu_custom_call.1} parent=1 // pred_check_branch
      %10 = sbr.rel (0) target = $region5
    $region4: #{tpu_custom_call.1} parent=1 // pred_region
      _
    $region5: #{tpu_custom_call.1} parent=1 // pred_fallthru
      _
    // Predicated region
    $region6: #{tpu_custom_call.1} parent=1 // pred_check
      _
    $region7: #{tpu_custom_call.1} parent=1 // pred_check_branch
      %12 = sbr.rel (0) target = $region9
    $region8: #{tpu_custom_call.1} parent=1 // pred_region
      _
    $region9: #{tpu_custom_call.1} parent=1 // pred_fallthru
      _
    // Predicated region
    $region10: #{tpu_custom_call.1} parent=1 // pred_check
      _
    $region11: #{tpu_custom_call.1} parent=1 // pred_check_branch
      %14 = sbr.rel (0) target = $region13
    $region12: #{tpu_custom_call.1} parent=1 // pred_region
      _
    $region13: #{tpu_custom_call.1} parent=1 // pred_fallthru
      _
    %v15 = vld [vmem:[%s0] sm:$0xff]
    %v16 = vld [vmem:[%s0 + $0x8] sm:$0xff]
    %v17 = vld [vmem:[%s0 + $0x10] sm:$0xff]
    %v18 = vld [vmem:[%s0 + $0x18] sm:$0xff]
    %v19 = vld [vmem:[%s1] sm:$0xf]
    %v20 = vld [vmem:[%s1 + $0x4] sm:$0xf]
    %v21 = vld [vmem:[%s1 + $0x8] sm:$0xf]
    %v22 = vld [vmem:[%s1 + $0xc] sm:$0xf]
    %v23 = vld [vmem:[%s1 + $0x10] sm:$0xf]
    %v24 = vld [vmem:[%s1 + $0x14] sm:$0xf]
    %v25 = vld [vmem:[%s1 + $0x18] sm:$0xf]
    %v26 = vld [vmem:[%s1 + $0x1c] sm:$0xf]
    %v27 = vld [vmem:[%s1 + $0x20] sm:$0xf]
    %v28 = vld [vmem:[%s1 + $0x24] sm:$0xf]
    %v29 = vld [vmem:[%s1 + $0x28] sm:$0xf]
    %v30 = vld [vmem:[%s1 + $0x2c] sm:$0xf]
    %v31 = vld [vmem:[%s1 + $0x30] sm:$0xf]
    %v32 = vld [vmem:[%s1 + $0x34] sm:$0xf]
    %v33 = vld [vmem:[%s1 + $0x38] sm:$0xf]
    %v34 = vld [vmem:[%s1 + $0x3c] sm:$0xf]
    %v35 = vld [vmem:[%s1 + $0x40] sm:$0xf]
    %v36 = vld [vmem:[%s1 + $0x44] sm:$0xf]
    %v37 = vld [vmem:[%s1 + $0x48] sm:$0xf]
    %v38 = vld [vmem:[%s1 + $0x4c] sm:$0xf]
    %v39 = vld [vmem:[%s1 + $0x50] sm:$0xf]
    %v40 = vld [vmem:[%s1 + $0x54] sm:$0xf]
    %v41 = vld [vmem:[%s1 + $0x58] sm:$0xf]
    %v42 = vld [vmem:[%s1 + $0x5c] sm:$0xf]
    %v43 = vld [vmem:[%s1 + $0x60] sm:$0xf]
    %v44 = vld [vmem:[%s1 + $0x64] sm:$0xf]
    %v45 = vld [vmem:[%s1 + $0x68] sm:$0xf]
    %v46 = vld [vmem:[%s1 + $0x6c] sm:$0xf]
    %v47 = vld [vmem:[%s1 + $0x70] sm:$0xf]
    %v48 = vld [vmem:[%s1 + $0x74] sm:$0xf]
    %v49 = vld [vmem:[%s1 + $0x78] sm:$0xf]
    %v50 = vld [vmem:[%s1 + $0x7c] sm:$0xf]
    %v51 = vld [vmem:[%s1 + $0x80] sm:$0xf]
    %v52 = vld [vmem:[%s1 + $0x84] sm:$0xf]
    %v53 = vld [vmem:[%s1 + $0x88] sm:$0xf]
    %v54 = vld [vmem:[%s1 + $0x8c] sm:$0xf]
    %v55 = vld [vmem:[%s1 + $0x90] sm:$0xf]
    %v56 = vld [vmem:[%s1 + $0x94] sm:$0xf]
    %v57 = vld [vmem:[%s1 + $0x98] sm:$0xf]
    %v58 = vld [vmem:[%s1 + $0x9c] sm:$0xf]
    %v59 = vld [vmem:[%s1 + $0xa0] sm:$0xf]
    %v60 = vld [vmem:[%s1 + $0xa4] sm:$0xf]
    %v61 = vld [vmem:[%s1 + $0xa8] sm:$0xf]
    %v62 = vld [vmem:[%s1 + $0xac] sm:$0xf]
    %v63 = vld [vmem:[%s1 + $0xb0] sm:$0xf]
    %v64 = vld [vmem:[%s1 + $0xb4] sm:$0xf]
    %v65 = vld [vmem:[%s1 + $0xb8] sm:$0xf]
    %v66 = vld [vmem:[%s1 + $0xbc] sm:$0xf]
    %v67 = vld [vmem:[%s1 + $0xc0] sm:$0xf]
    %v68 = vld [vmem:[%s1 + $0xc4] sm:$0xf]
    %v69 = vld [vmem:[%s1 + $0xc8] sm:$0xf]
    %v70 = vld [vmem:[%s1 + $0xcc] sm:$0xf]
    %v71 = vld [vmem:[%s1 + $0xd0] sm:$0xf]
    %v72 = vld [vmem:[%s1 + $0xd4] sm:$0xf]
    %v73 = vld [vmem:[%s1 + $0xd8] sm:$0xf]
    %v74 = vld [vmem:[%s1 + $0xdc] sm:$0xf]
    %v75 = vld [vmem:[%s1 + $0xe0] sm:$0xf]
    %v76 = vld [vmem:[%s1 + $0xe4] sm:$0xf]
    %v77 = vld [vmem:[%s1 + $0xe8] sm:$0xf]
    %v78 = vld [vmem:[%s1 + $0xec] sm:$0xf]
    %v79 = vld [vmem:[%s1 + $0xf0] sm:$0xf]
    %v80 = vld [vmem:[%s1 + $0xf4] sm:$0xf]
    %v81 = vld [vmem:[%s1 + $0xf8] sm:$0xf]
    %v82 = vld [vmem:[%s1 + $0xfc] sm:$0xf]
    %v83 = vld [vmem:[%s2] sm:$0x1]
    %v85 = vperm.slane %v83, 0
    %v91 = vunpack.c.l.b16 %v15
    %v92 = vunpack.c.h.b16 %v15
    %v93 = vunpack.c.l.b16 %v16
    %v94 = vunpack.c.h.b16 %v16
    %v95 = vunpack.c.l.b16 %v17
    %v96 = vunpack.c.h.b16 %v17
    %v97 = vunpack.c.l.b16 %v18
    %v98 = vunpack.c.h.b16 %v18
    %v99 = vpack.c.b16 %v95, %v91
    %v100 = vpack.c.b16 %v96, %v92
    %v101 = vpack.c.b16 %v97, %v93
    %v102 = vpack.c.b16 %v98, %v94
    %v171 = vunpack.c.l.b16 %v19
    %v172 = vunpack.c.l.b16 %v20
    %v173 = vunpack.c.l.b16 %v21
    %v174 = vunpack.c.l.b16 %v22
    %v175 = vunpack.c.l.b16 %v23
    %v176 = vunpack.c.l.b16 %v24
    %v177 = vunpack.c.l.b16 %v25
    %v178 = vunpack.c.l.b16 %v26
    %v179 = vunpack.c.l.b16 %v27
    %v180 = vunpack.c.l.b16 %v28
    %v181 = vunpack.c.l.b16 %v29
    %v182 = vunpack.c.l.b16 %v30
    %v183 = vunpack.c.l.b16 %v31
    %v184 = vunpack.c.l.b16 %v32
    %v185 = vunpack.c.l.b16 %v33
    %v186 = vunpack.c.l.b16 %v34
    %v187 = vunpack.c.l.b16 %v35
    %v188 = vunpack.c.l.b16 %v36
    %v189 = vunpack.c.l.b16 %v37
    %v190 = vunpack.c.l.b16 %v38
    %v191 = vunpack.c.l.b16 %v39
    %v192 = vunpack.c.l.b16 %v40
    %v193 = vunpack.c.l.b16 %v41
    %v194 = vunpack.c.l.b16 %v42
    %v195 = vunpack.c.l.b16 %v43
    %v196 = vunpack.c.l.b16 %v44
    %v197 = vunpack.c.l.b16 %v45
    %v198 = vunpack.c.l.b16 %v46
    %v199 = vunpack.c.l.b16 %v47
    %v200 = vunpack.c.l.b16 %v48
    %v201 = vunpack.c.l.b16 %v49
    %v202 = vunpack.c.l.b16 %v50
    %v203 = vunpack.c.l.b16 %v51
    %v204 = vunpack.c.l.b16 %v52
    %v205 = vunpack.c.l.b16 %v53
    %v206 = vunpack.c.l.b16 %v54
    %v207 = vunpack.c.l.b16 %v55
    %v208 = vunpack.c.l.b16 %v56
    %v209 = vunpack.c.l.b16 %v57
    %v210 = vunpack.c.l.b16 %v58
    %v211 = vunpack.c.l.b16 %v59
    %v212 = vunpack.c.l.b16 %v60
    %v213 = vunpack.c.l.b16 %v61
    %v214 = vunpack.c.l.b16 %v62
    %v215 = vunpack.c.l.b16 %v63
    %v216 = vunpack.c.l.b16 %v64
    %v217 = vunpack.c.l.b16 %v65
    %v218 = vunpack.c.l.b16 %v66
    %v219 = vunpack.c.l.b16 %v67
    %v220 = vunpack.c.l.b16 %v68
    %v221 = vunpack.c.l.b16 %v69
    %v222 = vunpack.c.l.b16 %v70
    %v223 = vunpack.c.l.b16 %v71
    %v224 = vunpack.c.l.b16 %v72
    %v225 = vunpack.c.l.b16 %v73
    %v226 = vunpack.c.l.b16 %v74
    %v227 = vunpack.c.l.b16 %v75
    %v228 = vunpack.c.l.b16 %v76
    %v229 = vunpack.c.l.b16 %v77
    %v230 = vunpack.c.l.b16 %v78
    %v231 = vunpack.c.l.b16 %v79
    %v232 = vunpack.c.l.b16 %v80
    %v233 = vunpack.c.l.b16 %v81
    %v234 = vunpack.c.l.b16 %v82
    %v235 = vpack.c.b16 %v172, %v171
    %v236 = vpack.c.b16 %v174, %v173
    %v237 = vpack.c.b16 %v176, %v175
    %v238 = vpack.c.b16 %v178, %v177
    %v239 = vpack.c.b16 %v180, %v179
    %v240 = vpack.c.b16 %v182, %v181
    %v241 = vpack.c.b16 %v184, %v183
    %v242 = vpack.c.b16 %v186, %v185
    %v243 = vpack.c.b16 %v188, %v187
    %v244 = vpack.c.b16 %v190, %v189
    %v245 = vpack.c.b16 %v192, %v191
    %v246 = vpack.c.b16 %v194, %v193
    %v247 = vpack.c.b16 %v196, %v195
    %v248 = vpack.c.b16 %v198, %v197
    %v249 = vpack.c.b16 %v200, %v199
    %v250 = vpack.c.b16 %v202, %v201
    %v251 = vpack.c.b16 %v204, %v203
    %v252 = vpack.c.b16 %v206, %v205
    %v253 = vpack.c.b16 %v208, %v207
    %v254 = vpack.c.b16 %v210, %v209
    %v255 = vpack.c.b16 %v212, %v211
    %v256 = vpack.c.b16 %v214, %v213
    %v257 = vpack.c.b16 %v216, %v215
    %v258 = vpack.c.b16 %v218, %v217
    %v259 = vpack.c.b16 %v220, %v219
    %v260 = vpack.c.b16 %v222, %v221
    %v261 = vpack.c.b16 %v224, %v223
    %v262 = vpack.c.b16 %v226, %v225
    %v263 = vpack.c.b16 %v228, %v227
    %v264 = vpack.c.b16 %v230, %v229
    %v265 = vpack.c.b16 %v232, %v231
    %v266 = vpack.c.b16 %v234, %v233
    %299 = vmatpush.bf16.msra.mxu0 %v242
    %300 = vmatpush.bf16.msra.mxu0 %v241
    %301 = vmatpush.bf16.msra.mxu0 %v240
    %302 = vmatpush.bf16.msra.mxu0 %v239
    %303 = vmatpush.bf16.msra.mxu0 %v238
    %304 = vmatpush.bf16.msra.mxu0 %v237
    %305 = vmatpush.bf16.msra.mxu0 %v236
    %306 = vmatpush.bf16.msra.mxu0 %v235
    %307 = vmatmul.bf16.gmra.mxu0 %v99
    %v308 = vpop.f32.mrf.mxu0
    %v309 = vadd.f32 %v85, %v308
    %v310 = vpop.f32.mrf.mxu0
    %v311 = vadd.f32 %v85, %v310
    %312 = vdwg.mxu0
    %313 = vmatpush.bf16.msra.mxu0 %v250
    %314 = vmatpush.bf16.msra.mxu0 %v249
    %315 = vmatpush.bf16.msra.mxu0 %v248
    %316 = vmatpush.bf16.msra.mxu0 %v247
    %317 = vmatpush.bf16.msra.mxu0 %v246
    %318 = vmatpush.bf16.msra.mxu0 %v245
    %319 = vmatpush.bf16.msra.mxu0 %v244
    %320 = vmatpush.bf16.msra.mxu0 %v243
    %321 = vmatmul.bf16.gmra.mxu0 %v100
    %v322 = vpop.f32.mrf.mxu0
    %v323 = vadd.f32 %v309, %v322
    %v324 = vpop.f32.mrf.mxu0
    %v325 = vadd.f32 %v311, %v324
    %326 = vdwg.mxu0
    %327 = vmatpush.bf16.msra.mxu0 %v258
    %328 = vmatpush.bf16.msra.mxu0 %v257
    %329 = vmatpush.bf16.msra.mxu0 %v256
    %330 = vmatpush.bf16.msra.mxu0 %v255
    %331 = vmatpush.bf16.msra.mxu0 %v254
    %332 = vmatpush.bf16.msra.mxu0 %v253
    %333 = vmatpush.bf16.msra.mxu0 %v252
    %334 = vmatpush.bf16.msra.mxu0 %v251
    %335 = vmatmul.bf16.gmra.mxu0 %v101
    %v336 = vpop.f32.mrf.mxu0
    %v337 = vadd.f32 %v323, %v336
    %v338 = vpop.f32.mrf.mxu0
    %v339 = vadd.f32 %v325, %v338
    %340 = vdwg.mxu0
    %341 = vmatpush.bf16.msra.mxu0 %v266
    %342 = vmatpush.bf16.msra.mxu0 %v265
    %343 = vmatpush.bf16.msra.mxu0 %v264
    %344 = vmatpush.bf16.msra.mxu0 %v263
    %345 = vmatpush.bf16.msra.mxu0 %v262
    %346 = vmatpush.bf16.msra.mxu0 %v261
    %347 = vmatpush.bf16.msra.mxu0 %v260
    %348 = vmatpush.bf16.msra.mxu0 %v259
    %349 = vmatmul.bf16.gmra.mxu0 %v102
    %v350 = vpop.f32.mrf.mxu0
    %v351 = vadd.f32 %v337, %v350
    %v352 = vpop.f32.mrf.mxu0
    %v353 = vadd.f32 %v339, %v352
    %354 = vdwg.mxu0
    %vm355 = vcmask 261120
    %356 = vst.msk [vmem:[#allocation2] sm:$0xff] %vm355, %v351
    %357 = vst.msk [vmem:[#allocation2 + $0x8] sm:$0xff] %vm355, %v353
    // Predicated region
    $region14: #{tpu_custom_call.1} parent=1 // pred_check
      _
    $region15: #{tpu_custom_call.1} parent=1 // pred_check_branch
      %359 = sbr.rel (0) target = $region17
    $region16: #{tpu_custom_call.1} parent=1 // pred_region
      %361 = vsyncadd [#allocation3], 0
      %s362 = sshll.u32 [#allocation2], 4
      %s363 = int_to_ptr.vmem [resolvable:$true] %s362
      %s364 = sshll.u32 %s3, 4
      %s365 = int_to_ptr.hbm [resolvable:$true] %s364
      %370 = dma.vmem_to_hbm [thread:$0]  %s363, 256, %s365, [#allocation3], 128, 128, 8
    $region17: #{tpu_custom_call.1} parent=1 // pred_fallthru
      _
    // Predicated region
    $region18: #{tpu_custom_call.1} parent=1 // pred_check
      _
    $region19: #{tpu_custom_call.1} parent=1 // pred_check_branch
      %372 = sbr.rel (0) target = $region21
    $region20: #{tpu_custom_call.1} parent=1 // pred_region
      %374 = dma.done [#allocation3], 256
    $region21: #{tpu_custom_call.1} parent=1 // pred_fallthru
      _
    %375 = vsyncpa [#allocation3], 1

</llo_original>
